<compile_context>
chip_gen: v6e
topology: v6e:2x2x1
jax: 0.10.0
libtpu: 0.0.40
codegen_flags: <defaults>
</compile_context>

<pallas_src>
import functools

import jax
import jax.numpy as jnp
from jax.experimental import pallas as pl
from jax.experimental.pallas import tpu as pltpu

_LANE = 128
_OUT_PAD = 8  # out_dim 3 padded to one sublane group of the transposed output


def _round_up(n, m):
    return ((n + m - 1) // m) * m


def mlp_kernel(x_ref, w1_ref, b1_ref, w2t_ref, b2t_ref, o_ref):
    # x tile: (tb, IN); cast to bf16 only if needed (MXU operand).
    x = x_ref[...]
    if x.dtype != jnp.bfloat16:
        x = x.astype(jnp.bfloat16)
    # (tb, IN) @ (IN, H) -> (tb, H), f32 accumulate on the MXU.
    h = jnp.dot(x, w1_ref[...], preferred_element_type=jnp.float32)
    h = jnp.maximum(h + b1_ref[...], 0.0)          # f32 bias + ReLU (VPU)
    # (OUT_PAD, H) contracted with (tb, H) over H -> (OUT_PAD, tb).
    # Result is the transposed output tile: batch lives on the lane axis.
    y = jax.lax.dot_general(
        w2t_ref[...], h.astype(jnp.bfloat16),
        dimension_numbers=(((1,), (1,)), ((), ())),
        preferred_element_type=jnp.float32)
    o_ref[...] = (y + b2t_ref[...]).astype(o_ref.dtype)


@functools.partial(jax.jit, static_argnames=("out_dim", "block_b"))
def mlp_forward(x, w1, b1, w2t, b2t, *, out_dim=3, block_b=2048):
    """x: (B, IN) f32 (or bf16);  w1: (IN, H) bf16;  b1: (1, H) f32;
    w2t: (OUT_PAD, H) bf16 (pre-transposed, zero-padded rows);
    b2t: (OUT_PAD, 1) f32.  Returns (B, out_dim) f32."""
    B, in_dim = x.shape
    hidden = w1.shape[1]
    out_rows = w2t.shape[0]

    # --- batch tile: no padding of x; partial tail tile is masked by Pallas.
    if B <= 256:
        tb = B                                   # single tiny step, full-extent blocks
    elif B <= block_b:
        # >=2 grid steps so both v7x TensorCores get work; lane-aligned tile.
        tb = min(block_b, _round_up(pl.cdiv(B, 2), _LANE))
    else:
        tb = block_b                             # multiple of 128 by construction
    grid = (pl.cdiv(B, tb),)

    nbytes = lambda a: a.size * jnp.dtype(a.dtype).itemsize
    cost = pl.CostEstimate(
        flops=2 * B * in_dim * hidden + 2 * B * hidden * out_rows,
        transcendentals=0,
        bytes_accessed=(nbytes(x) + nbytes(w1) + nbytes(b1) + nbytes(w2t)
                        + nbytes(b2t) + out_rows * B * 4),
    )

    out_t = pl.pallas_call(
        mlp_kernel,
        out_shape=jax.ShapeDtypeStruct((out_rows, B), jnp.float32),
        grid=grid,
        in_specs=[
            pl.BlockSpec((tb, in_dim), lambda i: (i, 0)),        # x tile (pipelined)
            pl.BlockSpec((in_dim, hidden), lambda i: (0, 0)),    # W1 resident
            pl.BlockSpec((1, hidden), lambda i: (0, 0)),         # b1 resident
            pl.BlockSpec((out_rows, hidden), lambda i: (0, 0)),  # W2^T resident
            pl.BlockSpec((out_rows, 1), lambda i: (0, 0)),       # b2 resident
        ],
        out_specs=pl.BlockSpec((out_rows, tb), lambda i: (0, i)),  # y^T, lane-dense
        compiler_params=pltpu.CompilerParams(
            dimension_semantics=("parallel",),
            vmem_limit_bytes=32 * 1024 * 1024),
        cost_estimate=cost,
    )(x, w1, b1, w2t, b2t)

    # Tiny (out_dim, B) -> (B, out_dim): 12 B/row instead of the old 512 B/row slice.
    return out_t[:out_dim].T


def init_params(key, input_dim=512, hidden_dim=64, out_dim=3):
    # Mirrors nn.Linear's U(-1/sqrt(fan_in), 1/sqrt(fan_in)); weights stored
    # in MXU-operand layout (bf16), biases f32. W2/b2 are pre-transposed and
    # zero-padded to _OUT_PAD rows ONCE here (hoisted out of the hot path).
    k1, k2, k3, k4 = jax.random.split(key, 4)
    bound1 = 1.0 / (input_dim ** 0.5)
    bound2 = 1.0 / (hidden_dim ** 0.5)
    w1 = jax.random.uniform(k1, (input_dim, hidden_dim), jnp.float32,
                            -bound1, bound1).astype(jnp.bfloat16)
    b1 = jax.random.uniform(k2, (1, hidden_dim), jnp.float32, -bound1, bound1)
    w2 = jax.random.uniform(k3, (hidden_dim, out_dim), jnp.float32,
                            -bound2, bound2).astype(jnp.bfloat16)
    b2 = jax.random.uniform(k4, (1, out_dim), jnp.float32, -bound2, bound2)
    w2t = jnp.zeros((_OUT_PAD, hidden_dim), jnp.bfloat16).at[:out_dim].set(w2.T)
    b2t = jnp.zeros((_OUT_PAD, 1), jnp.float32).at[:out_dim, 0].set(b2[0])
    return w1, b1, w2t, b2t


if __name__ == "__main__":
    key = jax.random.PRNGKey(0)
    kx, kp = jax.random.split(key)

    input_dim, hidden_dim, out_dim = 512, 64, 3
    w1, b1, w2t, b2t = init_params(kp, input_dim, hidden_dim, out_dim)

    def ref_fn(x):
        # Reference with the same mixed precision (bf16 MXU operands, f32 acc).
        h = jnp.dot(x.astype(jnp.bfloat16), w1,
                    preferred_element_type=jnp.float32) + b1
        h = jnp.maximum(h, 0.0)
        return (jnp.dot(h.astype(jnp.bfloat16), w2t[:out_dim].T,
                        preferred_element_type=jnp.float32) + b2t[:out_dim, 0])

    # batch=8 = tiny single-step path; batch=300 = 2-step grid with masked tail.
    for batch in (8, 300):
        x = jax.random.normal(jax.random.fold_in(kx, batch),
                              (batch, input_dim), jnp.float32)
        out = mlp_forward(x, w1, b1, w2t, b2t, out_dim=out_dim)
        jax.block_until_ready(out)
        assert out.shape == (batch, out_dim)
        ref = ref_fn(x)
        err = jnp.max(jnp.abs(out - ref))
        assert jnp.allclose(out, ref, atol=2e-3, rtol=2e-3), f"max abs err {err}"

    print("KERNEL_OK")
</pallas_src>

<mosaic_0001>
module attributes {stable_mosaic.version = 11 : i64} {
  func.func @mlp_kernel(%arg0: i32, %arg1: memref<8x512xf32, #tpu.memory_space<vmem>>, %arg2: memref<512x64xbf16, #tpu.memory_space<vmem>>, %arg3: memref<1x64xf32, #tpu.memory_space<vmem>>, %arg4: memref<8x64xbf16, #tpu.memory_space<vmem>>, %arg5: memref<8x1xf32, #tpu.memory_space<vmem>>, %arg6: memref<8x8xf32, #tpu.memory_space<vmem>>) attributes {dimension_semantics = [#tpu.dimension_semantics<parallel>], iteration_bounds = array<i64: 1>, scalar_prefetch = 0 : i64, scratch_operands = 0 : i64, tpu.core_type = #tpu.core_type<tc>, window_params = [{transform_indices = @transform_0, window_bounds = array<i64: 8, 512>}, {pipeline_mode = #tpu.pipeline_mode<synchronous>, transform_indices = @transform_1, window_bounds = array<i64: 512, 64>}, {pipeline_mode = #tpu.pipeline_mode<synchronous>, transform_indices = @transform_2, window_bounds = array<i64: 1, 64>}, {pipeline_mode = #tpu.pipeline_mode<synchronous>, transform_indices = @transform_3, window_bounds = array<i64: 8, 64>}, {pipeline_mode = #tpu.pipeline_mode<synchronous>, transform_indices = @transform_4, window_bounds = array<i64: 8, 1>}, {transform_indices = @transform_5, window_bounds = array<i64: 8, 8>}]} {
    %c0 = arith.constant 0 : index
    %c0_0 = arith.constant 0 : index
    %0 = vector.load %arg1[%c0, %c0_0] : memref<8x512xf32, #tpu.memory_space<vmem>>, vector<8x512xf32>
    %1 = arith.truncf %0 : vector<8x512xf32> to vector<8x512xbf16>
    %c0_1 = arith.constant 0 : index
    %c0_2 = arith.constant 0 : index
    %2 = vector.load %arg2[%c0_1, %c0_2] : memref<512x64xbf16, #tpu.memory_space<vmem>>, vector<512x64xbf16>
    %cst = arith.constant dense<0.000000e+00> : vector<8x64xf32>
    %3 = tpu.matmul %1, %2, %cst {dimension_numbers = #tpu.dot_dimension_numbers<[1], [0], [0], [1], [0, 0, 1, 1], [], []>} : vector<8x512xbf16>, vector<512x64xbf16>, vector<8x64xf32> -> vector<8x64xf32>
    %c0_3 = arith.constant 0 : index
    %c0_4 = arith.constant 0 : index
    %4 = vector.load %arg3[%c0_3, %c0_4] : memref<1x64xf32, #tpu.memory_space<vmem>>, vector<1x64xf32>
    %5 = vector.broadcast %4 : vector<1x64xf32> to vector<8x64xf32>
    %6 = arith.addf %3, %5 : vector<8x64xf32>
    %cst_5 = arith.constant 0.000000e+00 : f32
    %7 = vector.broadcast %cst_5 : f32 to vector<8x64xf32>
    %8 = arith.maximumf %6, %7 : vector<8x64xf32>
    %c0_6 = arith.constant 0 : index
    %c0_7 = arith.constant 0 : index
    %9 = vector.load %arg4[%c0_6, %c0_7] : memref<8x64xbf16, #tpu.memory_space<vmem>>, vector<8x64xbf16>
    %10 = arith.truncf %8 : vector<8x64xf32> to vector<8x64xbf16>
    %cst_8 = arith.constant dense<0.000000e+00> : vector<8x8xf32>
    %11 = tpu.matmul %9, %10, %cst_8 {dimension_numbers = #tpu.dot_dimension_numbers<[1], [1], [0], [0], [0, 0, 1, 0], [], []>} : vector<8x64xbf16>, vector<8x64xbf16>, vector<8x8xf32> -> vector<8x8xf32>
    %c0_9 = arith.constant 0 : index
    %c0_10 = arith.constant 0 : index
    %12 = vector.load %arg5[%c0_9, %c0_10] : memref<8x1xf32, #tpu.memory_space<vmem>>, vector<8x1xf32>
    %13 = vector.broadcast %12 : vector<8x1xf32> to vector<8x8xf32>
    %14 = arith.addf %11, %13 : vector<8x8xf32>
    %c0_11 = arith.constant 0 : index
    %c0_12 = arith.constant 0 : index
    %15 = vector.load %arg6[%c0_11, %c0_12] : memref<8x8xf32, #tpu.memory_space<vmem>>, vector<8x8xf32>
    tpu.vector_store %arg6[%c0_11, %c0_12], %14 {strides = array<i32>} : memref<8x8xf32, #tpu.memory_space<vmem>>, vector<8x8xf32>,
    return
  }
  func.func @transform_0(%arg0: i32) -> (i32, i32) {
    %c0_i32 = arith.constant 0 : i32
    %c0_i32_0 = arith.constant 0 : i32
    return %arg0, %c0_i32 : i32, i32
  }
  func.func @transform_1(%arg0: i32) -> (i32, i32) {
    %c0_i32 = arith.constant 0 : i32
    %c0_i32_0 = arith.constant 0 : i32
    %c0_i32_1 = arith.constant 0 : i32
    return %c0_i32, %c0_i32_0 : i32, i32
  }
  func.func @transform_2(%arg0: i32) -> (i32, i32) {
    %c0_i32 = arith.constant 0 : i32
    %c0_i32_0 = arith.constant 0 : i32
    %c0_i32_1 = arith.constant 0 : i32
    return %c0_i32, %c0_i32_0 : i32, i32
  }
  func.func @transform_3(%arg0: i32) -> (i32, i32) {
    %c0_i32 = arith.constant 0 : i32
    %c0_i32_0 = arith.constant 0 : i32
    %c0_i32_1 = arith.constant 0 : i32
    return %c0_i32, %c0_i32_0 : i32, i32
  }
  func.func @transform_4(%arg0: i32) -> (i32, i32) {
    %c0_i32 = arith.constant 0 : i32
    %c0_i32_0 = arith.constant 0 : i32
    %c0_i32_1 = arith.constant 0 : i32
    return %c0_i32, %c0_i32_0 : i32, i32
  }
  func.func @transform_5(%arg0: i32) -> (i32, i32) {
    %c0_i32 = arith.constant 0 : i32
    %c0_i32_0 = arith.constant 0 : i32
    return %c0_i32, %arg0 : i32, i32
  }
}

</mosaic_0001>

<llo_original>
// kernel: mlp_forward.1
$region0: #{mlp_forward.1}
  #allocation0 [shape = 'u32[]', space=smem, size = 0x4, offset = 0x4, fixed_abs, tag = 'smem constant byte address 0x4 - core index']
  #allocation1 [shape = 'u32[144,128]{1,0:T(1,128)}', space=vmem, size = 0x12000, scoped, tag = 'internal scratch']
  %s0 = inlined_call_operand.vmem [shape: f32[8,512], index: 0, kind: input, shape index: {}]
  %s1 = inlined_call_operand.vmem [shape: bf16[512,64], index: 1, kind: input, shape index: {}]
  %s2 = inlined_call_operand.vmem [shape: f32[1,64], index: 2, kind: input, shape index: {}]
  %s3 = inlined_call_operand.vmem [shape: bf16[8,64], index: 3, kind: input, shape index: {}]
  %s4 = inlined_call_operand.vmem [shape: f32[8,1], index: 4, kind: input, shape index: {}]
  %s5 = inlined_call_operand.vmem [shape: f32[8,8], index: 5, kind: output, shape index: {}]
  %s6 = sld [smem:[#allocation0]]
  $region30: #{mlp_forward.1} parent=0
    _
  %s8 = ssub.s32 1, %s6
  %s9 = scalar_select 0, %s8, %s6
  // Predicated region
  $region2: #{mlp_forward.1} parent=0 // pred_check
    _
  $region3: #{mlp_forward.1} parent=0 // pred_check_branch
    %11 = sbr.rel (0) target = $region5
  $region4: #{mlp_forward.1} parent=0 // pred_region
    _
  $region5: #{mlp_forward.1} parent=0 // pred_fallthru
    _
  // Predicated region
  $region6: #{mlp_forward.1} parent=0 // pred_check
    _
  $region7: #{mlp_forward.1} parent=0 // pred_check_branch
    %13 = sbr.rel (0) target = $region9
  $region8: #{mlp_forward.1} parent=0 // pred_region
    _
  $region9: #{mlp_forward.1} parent=0 // pred_fallthru
    _
  // Predicated region
  $region10: #{mlp_forward.1} parent=0 // pred_check
    _
  $region11: #{mlp_forward.1} parent=0 // pred_check_branch
    %15 = sbr.rel (0) target = $region13
  $region12: #{mlp_forward.1} parent=0 // pred_region
    _
  $region13: #{mlp_forward.1} parent=0 // pred_fallthru
    _
  // Predicated region
  $region14: #{mlp_forward.1} parent=0 // pred_check
    _
  $region15: #{mlp_forward.1} parent=0 // pred_check_branch
    %17 = sbr.rel (0) target = $region17
  $region16: #{mlp_forward.1} parent=0 // pred_region
    _
  $region17: #{mlp_forward.1} parent=0 // pred_fallthru
    _
  // Predicated region
  $region18: #{mlp_forward.1} parent=0 // pred_check
    _
  $region19: #{mlp_forward.1} parent=0 // pred_check_branch
    %19 = sbr.rel (0) target = $region21
  $region20: #{mlp_forward.1} parent=0 // pred_region
    _
  $region21: #{mlp_forward.1} parent=0 // pred_fallthru
    _
  %v21 = vld [vmem:[%s0] sm:$0xff]
  %v22 = vld [vmem:[%s0 + $0x8] sm:$0xff]
  %v23 = vld [vmem:[%s0 + $0x10] sm:$0xff]
  %v24 = vld [vmem:[%s0 + $0x18] sm:$0xff]
  %v25 = vpack.c.bf16 %v21, %v21
  %v26 = vpack.c.bf16 %v22, %v22
  %v27 = vpack.c.bf16 %v23, %v23
  %v28 = vpack.c.bf16 %v24, %v24
  %v29 = vld [vmem:[%s1] sm:$0xf]
  %v30 = vld [vmem:[%s1 + $0x4] sm:$0xf]
  %v31 = vld [vmem:[%s1 + $0x8] sm:$0xf]
  %v32 = vld [vmem:[%s1 + $0xc] sm:$0xf]
  %v33 = vld [vmem:[%s1 + $0x10] sm:$0xf]
  %v34 = vld [vmem:[%s1 + $0x14] sm:$0xf]
  %v35 = vld [vmem:[%s1 + $0x18] sm:$0xf]
  %v36 = vld [vmem:[%s1 + $0x1c] sm:$0xf]
  %v37 = vld [vmem:[%s1 + $0x20] sm:$0xf]
  %v38 = vld [vmem:[%s1 + $0x24] sm:$0xf]
  %v39 = vld [vmem:[%s1 + $0x28] sm:$0xf]
  %v40 = vld [vmem:[%s1 + $0x2c] sm:$0xf]
  %v41 = vld [vmem:[%s1 + $0x30] sm:$0xf]
  %v42 = vld [vmem:[%s1 + $0x34] sm:$0xf]
  %v43 = vld [vmem:[%s1 + $0x38] sm:$0xf]
  %v44 = vld [vmem:[%s1 + $0x3c] sm:$0xf]
  %v45 = vld [vmem:[%s1 + $0x40] sm:$0xf]
  %v46 = vld [vmem:[%s1 + $0x44] sm:$0xf]
  %v47 = vld [vmem:[%s1 + $0x48] sm:$0xf]
  %v48 = vld [vmem:[%s1 + $0x4c] sm:$0xf]
  %v49 = vld [vmem:[%s1 + $0x50] sm:$0xf]
  %v50 = vld [vmem:[%s1 + $0x54] sm:$0xf]
  %v51 = vld [vmem:[%s1 + $0x58] sm:$0xf]
  %v52 = vld [vmem:[%s1 + $0x5c] sm:$0xf]
  %v53 = vld [vmem:[%s1 + $0x60] sm:$0xf]
  %v54 = vld [vmem:[%s1 + $0x64] sm:$0xf]
  %v55 = vld [vmem:[%s1 + $0x68] sm:$0xf]
  %v56 = vld [vmem:[%s1 + $0x6c] sm:$0xf]
  %v57 = vld [vmem:[%s1 + $0x70] sm:$0xf]
  %v58 = vld [vmem:[%s1 + $0x74] sm:$0xf]
  %v59 = vld [vmem:[%s1 + $0x78] sm:$0xf]
  %v60 = vld [vmem:[%s1 + $0x7c] sm:$0xf]
  %v61 = vld [vmem:[%s1 + $0x80] sm:$0xf]
  %v62 = vld [vmem:[%s1 + $0x84] sm:$0xf]
  %v63 = vld [vmem:[%s1 + $0x88] sm:$0xf]
  %v64 = vld [vmem:[%s1 + $0x8c] sm:$0xf]
  %v65 = vld [vmem:[%s1 + $0x90] sm:$0xf]
  %v66 = vld [vmem:[%s1 + $0x94] sm:$0xf]
  %v67 = vld [vmem:[%s1 + $0x98] sm:$0xf]
  %v68 = vld [vmem:[%s1 + $0x9c] sm:$0xf]
  %v69 = vld [vmem:[%s1 + $0xa0] sm:$0xf]
  %v70 = vld [vmem:[%s1 + $0xa4] sm:$0xf]
  %v71 = vld [vmem:[%s1 + $0xa8] sm:$0xf]
  %v72 = vld [vmem:[%s1 + $0xac] sm:$0xf]
  %v73 = vld [vmem:[%s1 + $0xb0] sm:$0xf]
  %v74 = vld [vmem:[%s1 + $0xb4] sm:$0xf]
  %v75 = vld [vmem:[%s1 + $0xb8] sm:$0xf]
  %v76 = vld [vmem:[%s1 + $0xbc] sm:$0xf]
  %v77 = vld [vmem:[%s1 + $0xc0] sm:$0xf]
  %v78 = vld [vmem:[%s1 + $0xc4] sm:$0xf]
  %v79 = vld [vmem:[%s1 + $0xc8] sm:$0xf]
  %v80 = vld [vmem:[%s1 + $0xcc] sm:$0xf]
  %v81 = vld [vmem:[%s1 + $0xd0] sm:$0xf]
  %v82 = vld [vmem:[%s1 + $0xd4] sm:$0xf]
  %v83 = vld [vmem:[%s1 + $0xd8] sm:$0xf]
  %v84 = vld [vmem:[%s1 + $0xdc] sm:$0xf]
  %v85 = vld [vmem:[%s1 + $0xe0] sm:$0xf]
  %v86 = vld [vmem:[%s1 + $0xe4] sm:$0xf]
  %v87 = vld [vmem:[%s1 + $0xe8] sm:$0xf]
  %v88 = vld [vmem:[%s1 + $0xec] sm:$0xf]
  %v89 = vld [vmem:[%s1 + $0xf0] sm:$0xf]
  %v90 = vld [vmem:[%s1 + $0xf4] sm:$0xf]
  %v91 = vld [vmem:[%s1 + $0xf8] sm:$0xf]
  %v92 = vld [vmem:[%s1 + $0xfc] sm:$0xf]
  %v93 = vld [vmem:[%s2] sm:$0x1]
  %v95 = vlaneseq
  %v96 = vshrl.u32 %v95, 7
  %v97 = vsub.s32 0, %v96
  %v98 = vrot.slane %v93, %v97
  %v164 = vunpack.c.l.b16 %v29
  %v165 = vunpack.c.l.b16 %v30
  %v166 = vunpack.c.l.b16 %v31
  %v167 = vunpack.c.l.b16 %v32
  %v168 = vunpack.c.l.b16 %v33
  %v169 = vunpack.c.l.b16 %v34
  %v170 = vunpack.c.l.b16 %v35
  %v171 = vunpack.c.l.b16 %v36
  %v172 = vunpack.c.l.b16 %v37
  %v173 = vunpack.c.l.b16 %v38
  %v174 = vunpack.c.l.b16 %v39
  %v175 = vunpack.c.l.b16 %v40
  %v176 = vunpack.c.l.b16 %v41
  %v177 = vunpack.c.l.b16 %v42
  %v178 = vunpack.c.l.b16 %v43
  %v179 = vunpack.c.l.b16 %v44
  %v180 = vunpack.c.l.b16 %v45
  %v181 = vunpack.c.l.b16 %v46
  %v182 = vunpack.c.l.b16 %v47
  %v183 = vunpack.c.l.b16 %v48
  %v184 = vunpack.c.l.b16 %v49
  %v185 = vunpack.c.l.b16 %v50
  %v186 = vunpack.c.l.b16 %v51
  %v187 = vunpack.c.l.b16 %v52
  %v188 = vunpack.c.l.b16 %v53
  %v189 = vunpack.c.l.b16 %v54
  %v190 = vunpack.c.l.b16 %v55
  %v191 = vunpack.c.l.b16 %v56
  %v192 = vunpack.c.l.b16 %v57
  %v193 = vunpack.c.l.b16 %v58
  %v194 = vunpack.c.l.b16 %v59
  %v195 = vunpack.c.l.b16 %v60
  %v196 = vunpack.c.l.b16 %v61
  %v197 = vunpack.c.l.b16 %v62
  %v198 = vunpack.c.l.b16 %v63
  %v199 = vunpack.c.l.b16 %v64
  %v200 = vunpack.c.l.b16 %v65
  %v201 = vunpack.c.l.b16 %v66
  %v202 = vunpack.c.l.b16 %v67
  %v203 = vunpack.c.l.b16 %v68
  %v204 = vunpack.c.l.b16 %v69
  %v205 = vunpack.c.l.b16 %v70
  %v206 = vunpack.c.l.b16 %v71
  %v207 = vunpack.c.l.b16 %v72
  %v208 = vunpack.c.l.b16 %v73
  %v209 = vunpack.c.l.b16 %v74
  %v210 = vunpack.c.l.b16 %v75
  %v211 = vunpack.c.l.b16 %v76
  %v212 = vunpack.c.l.b16 %v77
  %v213 = vunpack.c.l.b16 %v78
  %v214 = vunpack.c.l.b16 %v79
  %v215 = vunpack.c.l.b16 %v80
  %v216 = vunpack.c.l.b16 %v81
  %v217 = vunpack.c.l.b16 %v82
  %v218 = vunpack.c.l.b16 %v83
  %v219 = vunpack.c.l.b16 %v84
  %v220 = vunpack.c.l.b16 %v85
  %v221 = vunpack.c.l.b16 %v86
  %v222 = vunpack.c.l.b16 %v87
  %v223 = vunpack.c.l.b16 %v88
  %v224 = vunpack.c.l.b16 %v89
  %v225 = vunpack.c.l.b16 %v90
  %v226 = vunpack.c.l.b16 %v91
  %v227 = vunpack.c.l.b16 %v92
  %v228 = vpack.c.b16 %v165, %v164
  %v229 = vpack.c.b16 %v167, %v166
  %v230 = vpack.c.b16 %v169, %v168
  %v231 = vpack.c.b16 %v171, %v170
  %v232 = vpack.c.b16 %v173, %v172
  %v233 = vpack.c.b16 %v175, %v174
  %v234 = vpack.c.b16 %v177, %v176
  %v235 = vpack.c.b16 %v179, %v178
  %v236 = vpack.c.b16 %v181, %v180
  %v237 = vpack.c.b16 %v183, %v182
  %v238 = vpack.c.b16 %v185, %v184
  %v239 = vpack.c.b16 %v187, %v186
  %v240 = vpack.c.b16 %v189, %v188
  %v241 = vpack.c.b16 %v191, %v190
  %v242 = vpack.c.b16 %v193, %v192
  %v243 = vpack.c.b16 %v195, %v194
  %v244 = vpack.c.b16 %v197, %v196
  %v245 = vpack.c.b16 %v199, %v198
  %v246 = vpack.c.b16 %v201, %v200
  %v247 = vpack.c.b16 %v203, %v202
  %v248 = vpack.c.b16 %v205, %v204
  %v249 = vpack.c.b16 %v207, %v206
  %v250 = vpack.c.b16 %v209, %v208
  %v251 = vpack.c.b16 %v211, %v210
  %v252 = vpack.c.b16 %v213, %v212
  %v253 = vpack.c.b16 %v215, %v214
  %v254 = vpack.c.b16 %v217, %v216
  %v255 = vpack.c.b16 %v219, %v218
  %v256 = vpack.c.b16 %v221, %v220
  %v257 = vpack.c.b16 %v223, %v222
  %v258 = vpack.c.b16 %v225, %v224
  %v259 = vpack.c.b16 %v227, %v226
  %292 = vmatprep.subr.bf16.mxu0 0
  %293 = vmatpush1.bf16.msra.mxu0 %v235
  %294 = vmatprep.subr.bf16.mxu0 0
  %295 = vmatpush1.bf16.msra.mxu0 %v234
  %296 = vmatprep.subr.bf16.mxu0 0
  %297 = vmatpush1.bf16.msra.mxu0 %v233
  %298 = vmatprep.subr.bf16.mxu0 0
  %299 = vmatpush1.bf16.msra.mxu0 %v232
  %300 = vmatprep.subr.bf16.mxu0 0
  %301 = vmatpush1.bf16.msra.mxu0 %v231
  %302 = vmatprep.subr.bf16.mxu0 0
  %303 = vmatpush1.bf16.msra.mxu0 %v230
  %304 = vmatprep.subr.bf16.mxu0 0
  %305 = vmatpush1.bf16.msra.mxu0 %v229
  %306 = vmatprep.subr.bf16.mxu0 0
  %307 = vmatpush1.bf16.msra.mxu0 %v228
  %308 = vmatprep.subr.bf16.mxu0 0
  %309 = vmatpush2.bf16.msra.mxu0 %v243
  %310 = vmatprep.subr.bf16.mxu0 0
  %311 = vmatpush2.bf16.msra.mxu0 %v242
  %312 = vmatprep.subr.bf16.mxu0 0
  %313 = vmatpush2.bf16.msra.mxu0 %v241
  %314 = vmatprep.subr.bf16.mxu0 0
  %315 = vmatpush2.bf16.msra.mxu0 %v240
  %316 = vmatprep.subr.bf16.mxu0 0
  %317 = vmatpush2.bf16.msra.mxu0 %v239
  %318 = vmatprep.subr.bf16.mxu0 0
  %319 = vmatpush2.bf16.msra.mxu0 %v238
  %320 = vmatprep.subr.bf16.mxu0 0
  %321 = vmatpush2.bf16.msra.mxu0 %v237
  %322 = vmatprep.subr.bf16.mxu0 0
  %323 = vmatpush2.bf16.msra.mxu0 %v236
  %324 = vmatprep.mubr.bf16.mxu0 %v26
  %325 = vmatmul.mubr.bf16.gmra.mxu0 %v25
  %v326 = vpop.f32.mrf.mxu0
  %v327 = vadd.f32 %v98, %v326
  %v328 = vpop.f32.mrf.mxu0
  %v329 = vpop.f32.mrf.mxu0
  %v330 = vpop.f32.mrf.mxu0
  %331 = vdwg.mxu0
  %332 = vmatprep.subr.bf16.mxu0 0
  %333 = vmatpush1.bf16.msra.mxu0 %v251
  %334 = vmatprep.subr.bf16.mxu0 0
  %335 = vmatpush1.bf16.msra.mxu0 %v250
  %336 = vmatprep.subr.bf16.mxu0 0
  %337 = vmatpush1.bf16.msra.mxu0 %v249
  %338 = vmatprep.subr.bf16.mxu0 0
  %339 = vmatpush1.bf16.msra.mxu0 %v248
  %340 = vmatprep.subr.bf16.mxu0 0
  %341 = vmatpush1.bf16.msra.mxu0 %v247
  %342 = vmatprep.subr.bf16.mxu0 0
  %343 = vmatpush1.bf16.msra.mxu0 %v246
  %344 = vmatprep.subr.bf16.mxu0 0
  %345 = vmatpush1.bf16.msra.mxu0 %v245
  %346 = vmatprep.subr.bf16.mxu0 0
  %347 = vmatpush1.bf16.msra.mxu0 %v244
  %348 = vmatprep.subr.bf16.mxu0 0
  %349 = vmatpush2.bf16.msra.mxu0 %v259
  %350 = vmatprep.subr.bf16.mxu0 0
  %351 = vmatpush2.bf16.msra.mxu0 %v258
  %352 = vmatprep.subr.bf16.mxu0 0
  %353 = vmatpush2.bf16.msra.mxu0 %v257
  %354 = vmatprep.subr.bf16.mxu0 0
  %355 = vmatpush2.bf16.msra.mxu0 %v256
  %356 = vmatprep.subr.bf16.mxu0 0
  %357 = vmatpush2.bf16.msra.mxu0 %v255
  %358 = vmatprep.subr.bf16.mxu0 0
  %359 = vmatpush2.bf16.msra.mxu0 %v254
  %360 = vmatprep.subr.bf16.mxu0 0
  %361 = vmatpush2.bf16.msra.mxu0 %v253
  %362 = vmatprep.subr.bf16.mxu0 0
  %363 = vmatpush2.bf16.msra.mxu0 %v252
  %364 = vmatprep.mubr.bf16.mxu0 %v28
  %365 = vmatmul.mubr.bf16.gmra.mxu0 %v27
  %v366 = vpop.f32.mrf.mxu0
  %v367 = vadd.f32 %v327, %v366
  %v368 = vpop.f32.mrf.mxu0
  %v369 = vpop.f32.mrf.mxu0
  %v370 = vpop.f32.mrf.mxu0
  %371 = vdwg.mxu0
  %v372 = vmax.f32 %v367, 0.0
  %v373 = vld [vmem:[%s3] sm:$0xf]
  %v374 = vpack.c.bf16 %v372, %v372
  %v375 = vld [vmem:[%s4] sm:$0xff]
  %377 = vset.pattern.permute.xlu0 0
  %378 = vperm.xlu0 %377, %v375
  %v379 = vpop.permute.xlu0 %378
  %vm381 = vcmask 523264
  %v383 = vsel %vm381, %v373, 0
  %v386 = vsel %vm381, %v374, 0
  %388 = vmatprep.subr.bf16.mxu0 0
  %389 = vmatpush1.bf16.xpose.msra.mxu0 0
  %390 = vmatprep.subr.bf16.mxu0 0
  %391 = vmatpush1.bf16.xpose.msra.mxu0 0
  %392 = vmatprep.subr.bf16.mxu0 0
  %393 = vmatpush1.bf16.xpose.msra.mxu0 0
  %394 = vmatprep.subr.bf16.mxu0 0
  %395 = vmatpush1.bf16.xpose.msra.mxu0 0
  %396 = vmatprep.subr.bf16.mxu0 0
  %397 = vmatpush1.bf16.xpose.msra.mxu0 0
  %398 = vmatprep.subr.bf16.mxu0 0
  %399 = vmatpush1.bf16.xpose.msra.mxu0 0
  %400 = vmatprep.subr.bf16.mxu0 0
  %401 = vmatpush1.bf16.xpose.msra.mxu0 0
  %402 = vmatprep.subr.bf16.mxu0 0
  %403 = vmatpush1.bf16.xpose.msra.mxu0 %v386
  %404 = vmatprep.subr.bf16.mxu0 0
  %405 = vmatpush2.bf16.xpose.msra.mxu0 0
  %406 = vmatprep.subr.bf16.mxu0 0
  %407 = vmatpush2.bf16.xpose.msra.mxu0 0
  %408 = vmatprep.subr.bf16.mxu0 0
  %409 = vmatpush2.bf16.xpose.msra.mxu0 0
  %410 = vmatprep.subr.bf16.mxu0 0
  %411 = vmatpush2.bf16.xpose.msra.mxu0 0
  %412 = vmatprep.subr.bf16.mxu0 0
  %413 = vmatpush2.bf16.xpose.msra.mxu0 0
  %414 = vmatprep.subr.bf16.mxu0 0
  %415 = vmatpush2.bf16.xpose.msra.mxu0 0
  %416 = vmatprep.subr.bf16.mxu0 0
  %417 = vmatpush2.bf16.xpose.msra.mxu0 0
  %418 = vmatprep.subr.bf16.mxu0 0
  %419 = vmatpush2.bf16.xpose.msra.mxu0 0
  %420 = vmatprep.mubr.bf16.mxu0 0
  %421 = vmatmul.mubr.bf16.gmra.mxu0 %v383
  %v422 = vpop.f32.mrf.mxu0
  %v423 = vadd.f32 %v379, %v422
  %v424 = vpop.f32.mrf.mxu0
  %v425 = vpop.f32.mrf.mxu0
  %v426 = vpop.f32.mrf.mxu0
  %427 = vdwg.mxu0
  %vm428 = vcmask 64512
  %429 = vst.msk [vmem:[%s5] sm:$0xff] %vm428, %v423
  // Predicated region
  $region22: #{mlp_forward.1} parent=0 // pred_check
    _
  $region23: #{mlp_forward.1} parent=0 // pred_check_branch
    %431 = sbr.rel (0) target = $region25
  $region24: #{mlp_forward.1} parent=0 // pred_region
    _
  $region25: #{mlp_forward.1} parent=0 // pred_fallthru
    _
  // Predicated region
  $region26: #{mlp_forward.1} parent=0 // pred_check
    _
  $region27: #{mlp_forward.1} parent=0 // pred_check_branch
    %433 = sbr.rel (0) target = $region29
  $region28: #{mlp_forward.1} parent=0 // pred_region
    _
  $region29: #{mlp_forward.1} parent=0 // pred_fallthru
    _

</llo_original>
